<compile_context>
chip_gen: v5e
topology: v5e:2x2
jax: 0.10.0
libtpu: 0.0.40
codegen_flags: <defaults>
</compile_context>

<pallas_src>
import functools

import jax
import jax.numpy as jnp
from jax import lax
from jax.experimental import pallas as pl
from jax.experimental.pallas import tpu as pltpu

PROP_NAMES = ("heat", "wave", "diffusion")


# ----------------------------------------------------------------------------
# Pallas kernel: fused 3-head MLP, feature-major activations.
#   x block    : (TILE_N, F)    native layout, contiguous HBM read
#   layer 1    : tanh(W1 @ x^T + b1)   -> (36, TILE_N)   (minor-dim contraction)
#   layer 2    : tanh(W2 @ h1 + b2)    -> (36, TILE_N)   (W2 block-diagonal)
#   layer 3    : relu(W3 @ h2 + b3)    -> (3,  TILE_N)   (one row per head)
# ----------------------------------------------------------------------------
def _fused_heads_kernel(x_ref, w1_ref, b1_ref, w2_ref, b2_ref, w3_ref, b3_ref,
                        ot_ref):
    # Contract the minor (F) dims of W1 (H,F) and x (TILE_N,F): this is
    # W1 @ x^T, the standard attention-style MXU pattern, and it lands the
    # activations feature-major (batch on lanes) without materializing x^T.
    h1 = jnp.tanh(
        lax.dot_general(w1_ref[...], x_ref[...],
                        (((1,), (1,)), ((), ())),
                        preferred_element_type=jnp.float32)
        + b1_ref[...])                                                # (36, TN)
    h2 = jnp.tanh(
        jnp.dot(w2_ref[...], h1, preferred_element_type=jnp.float32)
        + b2_ref[...])                                                # (36, TN)
    h3 = (jnp.dot(w3_ref[...], h2, preferred_element_type=jnp.float32)
          + b3_ref[...])                                              # (3, TN)
    ot_ref[...] = jnp.maximum(h3, 0.0).astype(ot_ref.dtype)          # lane-dense


def _round_up(x, m):
    return ((x + m - 1) // m) * m


def _pick_tile(n, tile_n_max):
    """Lane-axis tile (multiple of 256).

    Splits batches that would fit one tile into two grid steps where possible
    so the "parallel" axis can shard across v7x's two TensorCores, and caps
    the tile at tile_n_max so double-buffered VMEM stays small everywhere.
    """
    n_r = _round_up(n, 256)
    half = _round_up(pl.cdiv(n_r, 2), 256)
    return min(tile_n_max, max(256, half))


def fused_heads_forward(xz_mat, fused_params, *, tile_n=4096):
    """Run all three heads at once.

    xz_mat: (N, F) f32.  Returns (3, N) f32 — one row per head
    (heat, wave, diffusion order).
    """
    assert tile_n % 256 == 0, "tile_n must be a multiple of 256 (lane axis)"
    n, f = xz_mat.shape
    w1f, b1f, w2f, b2f, w3f, b3f = fused_params
    hid = w1f.shape[0]          # 36 (3 heads x 12)
    n_heads = w3f.shape[0]      # 3

    tile = _pick_tile(n, tile_n)
    num_tiles = pl.cdiv(n, tile)
    n_out = num_tiles * tile    # output padded to full tiles; sliced below

    def const_spec(shape):
        # Constant block index => Pallas keeps the block resident (no re-DMA).
        return pl.BlockSpec(shape, lambda i: (0, 0))

    weight_elems = hid * f + hid * hid + n_heads * hid + 2 * hid + n_heads
    cost = pl.CostEstimate(
        flops=2 * n * (hid * f + hid * hid + n_heads * hid),
        transcendentals=2 * hid * n,
        bytes_accessed=4 * (n * f + n * n_heads + weight_elems),
    )

    out_t = pl.pallas_call(
        _fused_heads_kernel,
        out_shape=jax.ShapeDtypeStruct((n_heads, n_out), jnp.float32),
        grid=(num_tiles,),
        in_specs=[
            pl.BlockSpec((tile, f), lambda i: (i, 0)),               # x tile
            const_spec(w1f.shape), const_spec(b1f.shape),            # layer 1
            const_spec(w2f.shape), const_spec(b2f.shape),            # layer 2
            const_spec(w3f.shape), const_spec(b3f.shape),            # layer 3
        ],
        out_specs=pl.BlockSpec((n_heads, tile), lambda i: (0, i)),
        compiler_params=pltpu.CompilerParams(
            dimension_semantics=("parallel",)),
        cost_estimate=cost,
    )(xz_mat, w1f, b1f, w2f, b2f, w3f, b3f)

    return out_t[:, :n]                                              # (3, N)


# ----------------------------------------------------------------------------
# Parameter construction (PyTorch nn.Linear-style init, torch (out, in) layout).
# ----------------------------------------------------------------------------
def _init_linear(key, fan_in, fan_out):
    kw, kb = jax.random.split(key)
    bound = 1.0 / jnp.sqrt(float(fan_in))
    w = jax.random.uniform(kw, (fan_out, fan_in), jnp.float32, -bound, bound)
    b = jax.random.uniform(kb, (fan_out,), jnp.float32, -bound, bound)
    return w, b


def init_multi_property_heads(key, latent_dim=32, spacetime_dim=1, hidden=12):
    f = latent_dim + spacetime_dim
    heads = {}
    for idx, name in enumerate(PROP_NAMES):
        k = jax.random.fold_in(key, idx)
        k1, k2, k3 = jax.random.split(k, 3)
        w1, b1 = _init_linear(k1, f, hidden)
        w2, b2 = _init_linear(k2, hidden, hidden)
        w3, b3 = _init_linear(k3, hidden, 1)
        heads[name] = (w1, b1, w2, b2, w3, b3)
    return heads


def build_fused_params(heads):
    """Stack the per-head weights into one fused set (block-diagonal layers)."""
    w1f = jnp.concatenate([heads[p][0] for p in PROP_NAMES], axis=0)   # (36, F)
    b1f = jnp.concatenate([heads[p][1] for p in PROP_NAMES], axis=0)[:, None]
    w2f = jax.scipy.linalg.block_diag(*[heads[p][2] for p in PROP_NAMES])  # (36,36)
    b2f = jnp.concatenate([heads[p][3] for p in PROP_NAMES], axis=0)[:, None]
    w3f = jax.scipy.linalg.block_diag(*[heads[p][4] for p in PROP_NAMES])  # (3, 36)
    b3f = jnp.concatenate([heads[p][5] for p in PROP_NAMES], axis=0)[:, None]
    return (w1f, b1f, w2f, b2f, w3f, b3f)


class MultiPropertyHeadsPallas:
    """JAX/Pallas port of MultiPropertyHeads.forward(xz_mat, prop_name)."""

    def __init__(self, key, latent_dim=32, spacetime_dim=1, tile_n=4096):
        self.heads = init_multi_property_heads(key, latent_dim, spacetime_dim)
        self.fused = build_fused_params(self.heads)
        self._fwd = jax.jit(
            functools.partial(fused_heads_forward, tile_n=tile_n))

    def __call__(self, xz_mat, prop_name):
        # The fused kernel evaluates all heads at the cost of one head (the
        # call is HBM-bound on xz_mat); slice out the requested property.
        idx = PROP_NAMES.index(prop_name)
        out_t = self._fwd(xz_mat, self.fused)                         # (3, N)
        return out_t[idx][:, None]                                    # (N, 1)

    def forward_all(self, xz_mat):
        """All three heads from a single HBM read of xz_mat."""
        out_t = self._fwd(xz_mat, self.fused)
        return {p: out_t[i][:, None] for i, p in enumerate(PROP_NAMES)}


# Plain-JAX reference for the correctness check (torch-layout weights).
def _reference(xz_mat, params):
    w1, b1, w2, b2, w3, b3 = params
    h1 = jnp.tanh(xz_mat @ w1.T + b1)
    h2 = jnp.tanh(h1 @ w2.T + b2)
    return jnp.maximum(h2 @ w3.T + b3, 0.0)


if __name__ == "__main__":
    key = jax.random.PRNGKey(0)
    latent_dim, spacetime_dim = 32, 1

    model = MultiPropertyHeadsPallas(key, latent_dim, spacetime_dim)

    ok = True
    # Small single-tile batch and a ragged multi-tile batch.
    for n_points in (16, 1000):
        xz_mat = jax.random.normal(
            jax.random.fold_in(key, 100 + n_points),
            (n_points, latent_dim + spacetime_dim),
            dtype=jnp.float32,
        )

        for prop in PROP_NAMES:
            out = jax.block_until_ready(model(xz_mat, prop))
            ref = _reference(xz_mat, model.heads[prop])
            assert out.shape == (n_points, 1), out.shape
            ok &= bool(jnp.allclose(out, ref, atol=1e-5, rtol=1e-5))

        # All-heads path: xz_mat read from HBM exactly once for the 3 heads.
        all_out = model.forward_all(xz_mat)
        for prop in PROP_NAMES:
            ok &= bool(jnp.allclose(all_out[prop],
                                    _reference(xz_mat, model.heads[prop]),
                                    atol=1e-5, rtol=1e-5))

    assert ok, "Pallas fused-heads output mismatch vs f32 reference"
    print("KERNEL_OK")
</pallas_src>

<mosaic_0001>
module attributes {stable_mosaic.version = 11 : i64} {
  func.func @_fused_heads_kernel(%arg0: i32, %arg1: memref<256x33xf32, #tpu.memory_space<vmem>>, %arg2: memref<36x33xf32, #tpu.memory_space<vmem>>, %arg3: memref<36x1xf32, #tpu.memory_space<vmem>>, %arg4: memref<36x36xf32, #tpu.memory_space<vmem>>, %arg5: memref<36x1xf32, #tpu.memory_space<vmem>>, %arg6: memref<3x36xf32, #tpu.memory_space<vmem>>, %arg7: memref<3x1xf32, #tpu.memory_space<vmem>>, %arg8: memref<3x256xf32, #tpu.memory_space<vmem>>) attributes {dimension_semantics = [#tpu.dimension_semantics<parallel>], iteration_bounds = array<i64: 1>, scalar_prefetch = 0 : i64, scratch_operands = 0 : i64, tpu.core_type = #tpu.core_type<tc>, window_params = [{transform_indices = @transform_0, window_bounds = array<i64: 256, 33>}, {pipeline_mode = #tpu.pipeline_mode<synchronous>, transform_indices = @transform_1, window_bounds = array<i64: 36, 33>}, {pipeline_mode = #tpu.pipeline_mode<synchronous>, transform_indices = @transform_2, window_bounds = array<i64: 36, 1>}, {pipeline_mode = #tpu.pipeline_mode<synchronous>, transform_indices = @transform_3, window_bounds = array<i64: 36, 36>}, {pipeline_mode = #tpu.pipeline_mode<synchronous>, transform_indices = @transform_4, window_bounds = array<i64: 36, 1>}, {pipeline_mode = #tpu.pipeline_mode<synchronous>, transform_indices = @transform_5, window_bounds = array<i64: 3, 36>}, {pipeline_mode = #tpu.pipeline_mode<synchronous>, transform_indices = @transform_6, window_bounds = array<i64: 3, 1>}, {transform_indices = @transform_7, window_bounds = array<i64: 3, 256>}]} {
    %c0 = arith.constant 0 : index
    %c0_0 = arith.constant 0 : index
    %0 = vector.load %arg2[%c0, %c0_0] : memref<36x33xf32, #tpu.memory_space<vmem>>, vector<36x33xf32>
    %c0_1 = arith.constant 0 : index
    %c0_2 = arith.constant 0 : index
    %1 = vector.load %arg1[%c0_1, %c0_2] : memref<256x33xf32, #tpu.memory_space<vmem>>, vector<256x33xf32>
    %cst = arith.constant dense<0.000000e+00> : vector<36x256xf32>
    %2 = tpu.matmul %0, %1, %cst {dimension_numbers = #tpu.dot_dimension_numbers<[1], [1], [0], [0], [0, 0, 1, 0], [], []>} : vector<36x33xf32>, vector<256x33xf32>, vector<36x256xf32> -> vector<36x256xf32>
    %c0_3 = arith.constant 0 : index
    %c0_4 = arith.constant 0 : index
    %3 = vector.load %arg3[%c0_3, %c0_4] : memref<36x1xf32, #tpu.memory_space<vmem>>, vector<36x1xf32>
    %4 = vector.broadcast %3 : vector<36x1xf32> to vector<36x256xf32>
    %5 = arith.addf %2, %4 : vector<36x256xf32>
    %6 = math.tanh %5 : vector<36x256xf32>
    %c0_5 = arith.constant 0 : index
    %c0_6 = arith.constant 0 : index
    %7 = vector.load %arg4[%c0_5, %c0_6] : memref<36x36xf32, #tpu.memory_space<vmem>>, vector<36x36xf32>
    %cst_7 = arith.constant dense<0.000000e+00> : vector<36x256xf32>
    %8 = tpu.matmul %7, %6, %cst_7 {dimension_numbers = #tpu.dot_dimension_numbers<[1], [0], [0], [1], [0, 0, 1, 1], [], []>} : vector<36x36xf32>, vector<36x256xf32>, vector<36x256xf32> -> vector<36x256xf32>
    %c0_8 = arith.constant 0 : index
    %c0_9 = arith.constant 0 : index
    %9 = vector.load %arg5[%c0_8, %c0_9] : memref<36x1xf32, #tpu.memory_space<vmem>>, vector<36x1xf32>
    %10 = vector.broadcast %9 : vector<36x1xf32> to vector<36x256xf32>
    %11 = arith.addf %8, %10 : vector<36x256xf32>
    %12 = math.tanh %11 : vector<36x256xf32>
    %c0_10 = arith.constant 0 : index
    %c0_11 = arith.constant 0 : index
    %13 = vector.load %arg6[%c0_10, %c0_11] : memref<3x36xf32, #tpu.memory_space<vmem>>, vector<3x36xf32>
    %cst_12 = arith.constant dense<0.000000e+00> : vector<3x256xf32>
    %14 = tpu.matmul %13, %12, %cst_12 {dimension_numbers = #tpu.dot_dimension_numbers<[1], [0], [0], [1], [0, 0, 1, 1], [], []>} : vector<3x36xf32>, vector<36x256xf32>, vector<3x256xf32> -> vector<3x256xf32>
    %c0_13 = arith.constant 0 : index
    %c0_14 = arith.constant 0 : index
    %15 = vector.load %arg7[%c0_13, %c0_14] : memref<3x1xf32, #tpu.memory_space<vmem>>, vector<3x1xf32>
    %16 = vector.broadcast %15 : vector<3x1xf32> to vector<3x256xf32>
    %17 = arith.addf %14, %16 : vector<3x256xf32>
    %cst_15 = arith.constant 0.000000e+00 : f32
    %18 = vector.broadcast %cst_15 : f32 to vector<3x256xf32>
    %19 = arith.maximumf %17, %18 : vector<3x256xf32>
    %c0_16 = arith.constant 0 : index
    %c0_17 = arith.constant 0 : index
    %20 = vector.load %arg8[%c0_16, %c0_17] : memref<3x256xf32, #tpu.memory_space<vmem>>, vector<3x256xf32>
    tpu.vector_store %arg8[%c0_16, %c0_17], %19 {strides = array<i32>} : memref<3x256xf32, #tpu.memory_space<vmem>>, vector<3x256xf32>,
    return
  }
  func.func @transform_0(%arg0: i32) -> (i32, i32) {
    %c0_i32 = arith.constant 0 : i32
    %c0_i32_0 = arith.constant 0 : i32
    return %arg0, %c0_i32 : i32, i32
  }
  func.func @transform_1(%arg0: i32) -> (i32, i32) {
    %c0_i32 = arith.constant 0 : i32
    %c0_i32_0 = arith.constant 0 : i32
    %c0_i32_1 = arith.constant 0 : i32
    return %c0_i32, %c0_i32_0 : i32, i32
  }
  func.func @transform_2(%arg0: i32) -> (i32, i32) {
    %c0_i32 = arith.constant 0 : i32
    %c0_i32_0 = arith.constant 0 : i32
    %c0_i32_1 = arith.constant 0 : i32
    return %c0_i32, %c0_i32_0 : i32, i32
  }
  func.func @transform_3(%arg0: i32) -> (i32, i32) {
    %c0_i32 = arith.constant 0 : i32
    %c0_i32_0 = arith.constant 0 : i32
    %c0_i32_1 = arith.constant 0 : i32
    return %c0_i32, %c0_i32_0 : i32, i32
  }
  func.func @transform_4(%arg0: i32) -> (i32, i32) {
    %c0_i32 = arith.constant 0 : i32
    %c0_i32_0 = arith.constant 0 : i32
    %c0_i32_1 = arith.constant 0 : i32
    return %c0_i32, %c0_i32_0 : i32, i32
  }
  func.func @transform_5(%arg0: i32) -> (i32, i32) {
    %c0_i32 = arith.constant 0 : i32
    %c0_i32_0 = arith.constant 0 : i32
    %c0_i32_1 = arith.constant 0 : i32
    return %c0_i32, %c0_i32_0 : i32, i32
  }
  func.func @transform_6(%arg0: i32) -> (i32, i32) {
    %c0_i32 = arith.constant 0 : i32
    %c0_i32_0 = arith.constant 0 : i32
    %c0_i32_1 = arith.constant 0 : i32
    return %c0_i32, %c0_i32_0 : i32, i32
  }
  func.func @transform_7(%arg0: i32) -> (i32, i32) {
    %c0_i32 = arith.constant 0 : i32
    %c0_i32_0 = arith.constant 0 : i32
    return %c0_i32, %arg0 : i32, i32
  }
}

</mosaic_0001>

<llo_original>
// kernel: fused_heads_forward.1
$region0: #{fused_heads_forward.1}
  #allocation0 [shape = 'u32[]', space=smem, size = 0x4, offset = 0x4, fixed_abs, tag = 'smem constant byte address 0x4 - core index']
  #allocation1 [shape = 'u32[72,128]{1,0:T(1,128)}', space=vmem, size = 0x9000, scoped, tag = 'internal scratch']
  %s0 = inlined_call_operand.hbm [shape: f32[16,33], index: 0, kind: input, shape index: {}]
  %s1 = inlined_call_operand.vmem [shape: f32[36,33], index: 1, kind: input, shape index: {}]
  %s2 = inlined_call_operand.vmem [shape: f32[36,1], index: 2, kind: input, shape index: {}]
  %s3 = inlined_call_operand.vmem [shape: f32[36,36], index: 3, kind: input, shape index: {}]
  %s4 = inlined_call_operand.vmem [shape: f32[36,1], index: 4, kind: input, shape index: {}]
  %s5 = inlined_call_operand.vmem [shape: f32[3,36], index: 5, kind: input, shape index: {}]
  %s6 = inlined_call_operand.vmem [shape: f32[3,1], index: 6, kind: input, shape index: {}]
  %s7 = inlined_call_operand.vmem [shape: f32[3,256], index: 7, kind: output, shape index: {}]
  %s8 = sld [smem:[#allocation0]]
  $region42: #{fused_heads_forward.1} parent=0
    _
  %s10 = ssub.s32 1, %s8
  %s11 = scalar_select 0, %s10, %s8
  $region1: #{fused_heads_forward.1} parent=0
    #allocation2 [shape = 'u8[131072]{0}', space=vmem, size = 0x20000, scoped, tag = 'input window, operand 0, single buffered']
    #allocation3 [shape = 's32[1]{0}', space=sflag, size = 0x4, scoped, tag = 'scoped memory for fused_heads_forward.1']
    %12 = vsyncpa [#allocation3], 0
    // Predicated region
    $region2: #{fused_heads_forward.1} parent=1 // pred_check
      _
    $region3: #{fused_heads_forward.1} parent=1 // pred_check_branch
      %14 = sbr.rel (0) target = $region5
    $region4: #{fused_heads_forward.1} parent=1 // pred_region
      %16 = vsyncadd [#allocation3], 3840
      %s17 = sshll.u32 %s0, 4
      %s18 = int_to_ptr.hbm [resolvable:$true] %s17
      %s19 = sshll.u32 [#allocation2], 4
      %s20 = int_to_ptr.vmem [resolvable:$true] %s19
      %25 = dma.hbm_to_vmem [thread:$0]  %s18, 256, %s20, [#allocation3], 128, 128, 8
    $region5: #{fused_heads_forward.1} parent=1 // pred_fallthru
      _
    // Predicated region
    $region6: #{fused_heads_forward.1} parent=1 // pred_check
      _
    $region7: #{fused_heads_forward.1} parent=1 // pred_check_branch
      %27 = sbr.rel (0) target = $region9
    $region8: #{fused_heads_forward.1} parent=1 // pred_region
      _
    $region9: #{fused_heads_forward.1} parent=1 // pred_fallthru
      _
    // Predicated region
    $region10: #{fused_heads_forward.1} parent=1 // pred_check
      _
    $region11: #{fused_heads_forward.1} parent=1 // pred_check_branch
      %29 = sbr.rel (0) target = $region13
    $region12: #{fused_heads_forward.1} parent=1 // pred_region
      _
    $region13: #{fused_heads_forward.1} parent=1 // pred_fallthru
      _
    // Predicated region
    $region14: #{fused_heads_forward.1} parent=1 // pred_check
      _
    $region15: #{fused_heads_forward.1} parent=1 // pred_check_branch
      %31 = sbr.rel (0) target = $region17
    $region16: #{fused_heads_forward.1} parent=1 // pred_region
      _
    $region17: #{fused_heads_forward.1} parent=1 // pred_fallthru
      _
    // Predicated region
    $region18: #{fused_heads_forward.1} parent=1 // pred_check
      _
    $region19: #{fused_heads_forward.1} parent=1 // pred_check_branch
      %33 = sbr.rel (0) target = $region21
    $region20: #{fused_heads_forward.1} parent=1 // pred_region
      _
    $region21: #{fused_heads_forward.1} parent=1 // pred_fallthru
      _
    // Predicated region
    $region22: #{fused_heads_forward.1} parent=1 // pred_check
      _
    $region23: #{fused_heads_forward.1} parent=1 // pred_check_branch
      %35 = sbr.rel (0) target = $region25
    $region24: #{fused_heads_forward.1} parent=1 // pred_region
      _
    $region25: #{fused_heads_forward.1} parent=1 // pred_fallthru
      _
    // Predicated region
    $region26: #{fused_heads_forward.1} parent=1 // pred_check
      _
    $region27: #{fused_heads_forward.1} parent=1 // pred_check_branch
      %37 = sbr.rel (0) target = $region29
    $region28: #{fused_heads_forward.1} parent=1 // pred_region
      _
    $region29: #{fused_heads_forward.1} parent=1 // pred_fallthru
      _
    // Predicated region
    $region30: #{fused_heads_forward.1} parent=1 // pred_check
      _
    $region31: #{fused_heads_forward.1} parent=1 // pred_check_branch
      %39 = sbr.rel (0) target = $region33
    $region32: #{fused_heads_forward.1} parent=1 // pred_region
      %41 = dma.done [#allocation3], 4096
    $region33: #{fused_heads_forward.1} parent=1 // pred_fallthru
      _
    %v42 = vld [vmem:[%s1] sm:$0xff]
    %v43 = vld [vmem:[%s1 + $0x8] sm:$0xff]
    %v44 = vld [vmem:[%s1 + $0x10] sm:$0xff]
    %v45 = vld [vmem:[%s1 + $0x18] sm:$0xff]
    %v46 = vld [vmem:[%s1 + $0x20] sm:$0xf]
    %v47 = vld [vmem:[#allocation2] sm:$0xff]
    %v48 = vld [vmem:[#allocation2 + $0x8] sm:$0xff]
    %v49 = vld [vmem:[#allocation2 + $0x10] sm:$0xff]
    %v50 = vld [vmem:[#allocation2 + $0x18] sm:$0xff]
    %v51 = vld [vmem:[#allocation2 + $0x20] sm:$0xff]
    %v52 = vld [vmem:[#allocation2 + $0x28] sm:$0xff]
    %v53 = vld [vmem:[#allocation2 + $0x30] sm:$0xff]
    %v54 = vld [vmem:[#allocation2 + $0x38] sm:$0xff]
    %v55 = vld [vmem:[#allocation2 + $0x40] sm:$0xff]
    %v56 = vld [vmem:[#allocation2 + $0x48] sm:$0xff]
    %v57 = vld [vmem:[#allocation2 + $0x50] sm:$0xff]
    %v58 = vld [vmem:[#allocation2 + $0x58] sm:$0xff]
    %v59 = vld [vmem:[#allocation2 + $0x60] sm:$0xff]
    %v60 = vld [vmem:[#allocation2 + $0x68] sm:$0xff]
    %v61 = vld [vmem:[#allocation2 + $0x70] sm:$0xff]
    %v62 = vld [vmem:[#allocation2 + $0x78] sm:$0xff]
    %v63 = vld [vmem:[#allocation2 + $0x80] sm:$0xff]
    %v64 = vld [vmem:[#allocation2 + $0x88] sm:$0xff]
    %v65 = vld [vmem:[#allocation2 + $0x90] sm:$0xff]
    %v66 = vld [vmem:[#allocation2 + $0x98] sm:$0xff]
    %v67 = vld [vmem:[#allocation2 + $0xa0] sm:$0xff]
    %v68 = vld [vmem:[#allocation2 + $0xa8] sm:$0xff]
    %v69 = vld [vmem:[#allocation2 + $0xb0] sm:$0xff]
    %v70 = vld [vmem:[#allocation2 + $0xb8] sm:$0xff]
    %v71 = vld [vmem:[#allocation2 + $0xc0] sm:$0xff]
    %v72 = vld [vmem:[#allocation2 + $0xc8] sm:$0xff]
    %v73 = vld [vmem:[#allocation2 + $0xd0] sm:$0xff]
    %v74 = vld [vmem:[#allocation2 + $0xd8] sm:$0xff]
    %v75 = vld [vmem:[#allocation2 + $0xe0] sm:$0xff]
    %v76 = vld [vmem:[#allocation2 + $0xe8] sm:$0xff]
    %v77 = vld [vmem:[#allocation2 + $0xf0] sm:$0xff]
    %v78 = vld [vmem:[#allocation2 + $0xf8] sm:$0xff]
    %v79 = vld [vmem:[%s2] sm:$0xff]
    %v80 = vld [vmem:[%s2 + $0x8] sm:$0xff]
    %v81 = vld [vmem:[%s2 + $0x10] sm:$0xff]
    %v82 = vld [vmem:[%s2 + $0x18] sm:$0xff]
    %v83 = vld [vmem:[%s2 + $0x20] sm:$0xf]
    %85 = vset.pattern.permute.xlu0 0
    %86 = vperm.xlu0 %85, %v79
    %v87 = vpop.permute.xlu0 %86
    %90 = vset.pattern.permute.xlu0 0
    %91 = vperm.xlu0 %90, %v80
    %v92 = vpop.permute.xlu0 %91
    %95 = vset.pattern.permute.xlu0 0
    %96 = vperm.xlu0 %95, %v81
    %v97 = vpop.permute.xlu0 %96
    %100 = vset.pattern.permute.xlu0 0
    %101 = vperm.xlu0 %100, %v82
    %v102 = vpop.permute.xlu0 %101
    %105 = vset.pattern.permute.xlu0 0
    %106 = vperm.xlu0 %105, %v83
    %v107 = vpop.permute.xlu0 %106
    %vm109 = vcmask 269312
    %v111 = vsel %vm109, %v42, 0
    %v114 = vsel %vm109, %v43, 0
    %v117 = vsel %vm109, %v44, 0
    %v120 = vsel %vm109, %v45, 0
    %v123 = vsel %vm109, %v46, 0
    %v126 = vsel %vm109, %v47, 0
    %v129 = vsel %vm109, %v48, 0
    %v132 = vsel %vm109, %v49, 0
    %v135 = vsel %vm109, %v50, 0
    %v138 = vsel %vm109, %v51, 0
    %v141 = vsel %vm109, %v52, 0
    %v144 = vsel %vm109, %v53, 0
    %v147 = vsel %vm109, %v54, 0
    %v150 = vsel %vm109, %v55, 0
    %v153 = vsel %vm109, %v56, 0
    %v156 = vsel %vm109, %v57, 0
    %v159 = vsel %vm109, %v58, 0
    %v162 = vsel %vm109, %v59, 0
    %v165 = vsel %vm109, %v60, 0
    %v168 = vsel %vm109, %v61, 0
    %v171 = vsel %vm109, %v62, 0
    %v174 = vsel %vm109, %v63, 0
    %v177 = vsel %vm109, %v64, 0
    %v180 = vsel %vm109, %v65, 0
    %v183 = vsel %vm109, %v66, 0
    %v186 = vsel %vm109, %v67, 0
    %v189 = vsel %vm109, %v68, 0
    %v192 = vsel %vm109, %v69, 0
    %v195 = vsel %vm109, %v70, 0
    %v198 = vsel %vm109, %v71, 0
    %v201 = vsel %vm109, %v72, 0
    %v204 = vsel %vm109, %v73, 0
    %v207 = vsel %vm109, %v74, 0
    %v210 = vsel %vm109, %v75, 0
    %v213 = vsel %vm109, %v76, 0
    %v216 = vsel %vm109, %v77, 0
    %v219 = vsel %vm109, %v78, 0
    %221 = vmatpush.xpose.msra.mxu0 %v171
    %222 = vmatpush.xpose.msra.mxu0 %v168
    %223 = vmatpush.xpose.msra.mxu0 %v165
    %224 = vmatpush.xpose.msra.mxu0 %v162
    %225 = vmatpush.xpose.msra.mxu0 %v159
    %226 = vmatpush.xpose.msra.mxu0 %v156
    %227 = vmatpush.xpose.msra.mxu0 %v153
    %228 = vmatpush.xpose.msra.mxu0 %v150
    %229 = vmatpush.xpose.msra.mxu0 %v147
    %230 = vmatpush.xpose.msra.mxu0 %v144
    %231 = vmatpush.xpose.msra.mxu0 %v141
    %232 = vmatpush.xpose.msra.mxu0 %v138
    %233 = vmatpush.xpose.msra.mxu0 %v135
    %234 = vmatpush.xpose.msra.mxu0 %v132
    %235 = vmatpush.xpose.msra.mxu0 %v129
    %236 = vmatpush.xpose.msra.mxu0 %v126
    %237 = vmatmul.f32.gmra.mxu0 %v111
    %v238 = vpop.f32.mrf.mxu0
    %v239 = vadd.f32 %v87, %v238
    %240 = vmatmul.f32.gmra.mxu0 %v114
    %v241 = vpop.f32.mrf.mxu0
    %v242 = vadd.f32 %v92, %v241
    %243 = vmatmul.f32.gmra.mxu0 %v117
    %v244 = vpop.f32.mrf.mxu0
    %v245 = vadd.f32 %v97, %v244
    %246 = vmatmul.f32.gmra.mxu0 %v120
    %v247 = vpop.f32.mrf.mxu0
    %v248 = vadd.f32 %v102, %v247
    %249 = vmatmul.f32.gmra.mxu0 %v123
    %v250 = vpop.f32.mrf.mxu0
    %v251 = vadd.f32 %v107, %v250
    %252 = vdwg.mxu0
    %253 = vmatpush.xpose.msra.mxu0 %v219
    %254 = vmatpush.xpose.msra.mxu0 %v216
    %255 = vmatpush.xpose.msra.mxu0 %v213
    %256 = vmatpush.xpose.msra.mxu0 %v210
    %257 = vmatpush.xpose.msra.mxu0 %v207
    %258 = vmatpush.xpose.msra.mxu0 %v204
    %259 = vmatpush.xpose.msra.mxu0 %v201
    %260 = vmatpush.xpose.msra.mxu0 %v198
    %261 = vmatpush.xpose.msra.mxu0 %v195
    %262 = vmatpush.xpose.msra.mxu0 %v192
    %263 = vmatpush.xpose.msra.mxu0 %v189
    %264 = vmatpush.xpose.msra.mxu0 %v186
    %265 = vmatpush.xpose.msra.mxu0 %v183
    %266 = vmatpush.xpose.msra.mxu0 %v180
    %267 = vmatpush.xpose.msra.mxu0 %v177
    %268 = vmatpush.xpose.msra.mxu0 %v174
    %269 = vmatmul.f32.gmra.mxu0 %v111
    %v270 = vpop.f32.mrf.mxu0
    %v271 = vadd.f32 %v87, %v270
    %272 = vmatmul.f32.gmra.mxu0 %v114
    %v273 = vpop.f32.mrf.mxu0
    %v274 = vadd.f32 %v92, %v273
    %275 = vmatmul.f32.gmra.mxu0 %v117
    %v276 = vpop.f32.mrf.mxu0
    %v277 = vadd.f32 %v97, %v276
    %278 = vmatmul.f32.gmra.mxu0 %v120
    %v279 = vpop.f32.mrf.mxu0
    %v280 = vadd.f32 %v102, %v279
    %281 = vmatmul.f32.gmra.mxu0 %v123
    %v282 = vpop.f32.mrf.mxu0
    %v283 = vadd.f32 %v107, %v282
    %284 = vdwg.mxu0
    %v285 = vtanh.pop %v239
    %v286 = vtanh.pop %v271
    %v287 = vtanh.pop %v242
    %v288 = vtanh.pop %v274
    %v289 = vtanh.pop %v245
    %v290 = vtanh.pop %v277
    %v291 = vtanh.pop %v248
    %v292 = vtanh.pop %v280
    %v293 = vtanh.pop %v251
    %v294 = vtanh.pop %v283
    %v295 = vld [vmem:[%s3] sm:$0xff]
    %v296 = vld [vmem:[%s3 + $0x8] sm:$0xff]
    %v297 = vld [vmem:[%s3 + $0x10] sm:$0xff]
    %v298 = vld [vmem:[%s3 + $0x18] sm:$0xff]
    %v299 = vld [vmem:[%s3 + $0x20] sm:$0xf]
    %v300 = vld [vmem:[%s4] sm:$0xff]
    %v301 = vld [vmem:[%s4 + $0x8] sm:$0xff]
    %v302 = vld [vmem:[%s4 + $0x10] sm:$0xff]
    %v303 = vld [vmem:[%s4 + $0x18] sm:$0xff]
    %v304 = vld [vmem:[%s4 + $0x20] sm:$0xf]
    %306 = vset.pattern.permute.xlu0 0
    %307 = vperm.xlu0 %306, %v300
    %v308 = vpop.permute.xlu0 %307
    %311 = vset.pattern.permute.xlu0 0
    %312 = vperm.xlu0 %311, %v301
    %v313 = vpop.permute.xlu0 %312
    %316 = vset.pattern.permute.xlu0 0
    %317 = vperm.xlu0 %316, %v302
    %v318 = vpop.permute.xlu0 %317
    %321 = vset.pattern.permute.xlu0 0
    %322 = vperm.xlu0 %321, %v303
    %v323 = vpop.permute.xlu0 %322
    %326 = vset.pattern.permute.xlu0 0
    %327 = vperm.xlu0 %326, %v304
    %v328 = vpop.permute.xlu0 %327
    %vm330 = vcmask 293888
    %v332 = vsel %vm330, %v295, 0
    %v335 = vsel %vm330, %v296, 0
    %v338 = vsel %vm330, %v297, 0
    %v341 = vsel %vm330, %v298, 0
    %v344 = vsel %vm330, %v299, 0
    %vm346 = vcmask 1043456
    %v348 = vsel %vm346, %v293, 0
    %v351 = vsel %vm346, %v294, 0
    %353 = vmatpush.msra.mxu0 0.0
    %354 = vmatpush.msra.mxu0 0.0
    %355 = vmatpush.msra.mxu0 0.0
    %356 = vmatpush.msra.mxu0 0.0
    %357 = vmatpush.msra.mxu0 0.0
    %358 = vmatpush.msra.mxu0 0.0
    %359 = vmatpush.msra.mxu0 0.0
    %360 = vmatpush.msra.mxu0 0.0
    %361 = vmatpush.msra.mxu0 0.0
    %362 = vmatpush.msra.mxu0 0.0
    %363 = vmatpush.msra.mxu0 0.0
    %364 = vmatpush.msra.mxu0 %v348
    %365 = vmatpush.msra.mxu0 %v291
    %366 = vmatpush.msra.mxu0 %v289
    %367 = vmatpush.msra.mxu0 %v287
    %368 = vmatpush.msra.mxu0 %v285
    %369 = vmatmul.f32.gmra.mxu0 %v332
    %v370 = vpop.f32.mrf.mxu0
    %v371 = vadd.f32 %v308, %v370
    %372 = vmatmul.f32.gmra.mxu0 %v335
    %v373 = vpop.f32.mrf.mxu0
    %v374 = vadd.f32 %v313, %v373
    %375 = vmatmul.f32.gmra.mxu0 %v338
    %v376 = vpop.f32.mrf.mxu0
    %v377 = vadd.f32 %v318, %v376
    %378 = vmatmul.f32.gmra.mxu0 %v341
    %v379 = vpop.f32.mrf.mxu0
    %v380 = vadd.f32 %v323, %v379
    %381 = vmatmul.f32.gmra.mxu0 %v344
    %v382 = vpop.f32.mrf.mxu0
    %v383 = vadd.f32 %v328, %v382
    %384 = vdwg.mxu0
    %385 = vmatpush.msra.mxu0 0.0
    %386 = vmatpush.msra.mxu0 0.0
    %387 = vmatpush.msra.mxu0 0.0
    %388 = vmatpush.msra.mxu0 0.0
    %389 = vmatpush.msra.mxu0 0.0
    %390 = vmatpush.msra.mxu0 0.0
    %391 = vmatpush.msra.mxu0 0.0
    %392 = vmatpush.msra.mxu0 0.0
    %393 = vmatpush.msra.mxu0 0.0
    %394 = vmatpush.msra.mxu0 0.0
    %395 = vmatpush.msra.mxu0 0.0
    %396 = vmatpush.msra.mxu0 %v351
    %397 = vmatpush.msra.mxu0 %v292
    %398 = vmatpush.msra.mxu0 %v290
    %399 = vmatpush.msra.mxu0 %v288
    %400 = vmatpush.msra.mxu0 %v286
    %401 = vmatmul.f32.gmra.mxu0 %v332
    %v402 = vpop.f32.mrf.mxu0
    %v403 = vadd.f32 %v308, %v402
    %404 = vmatmul.f32.gmra.mxu0 %v335
    %v405 = vpop.f32.mrf.mxu0
    %v406 = vadd.f32 %v313, %v405
    %407 = vmatmul.f32.gmra.mxu0 %v338
    %v408 = vpop.f32.mrf.mxu0
    %v409 = vadd.f32 %v318, %v408
    %410 = vmatmul.f32.gmra.mxu0 %v341
    %v411 = vpop.f32.mrf.mxu0
    %v412 = vadd.f32 %v323, %v411
    %413 = vmatmul.f32.gmra.mxu0 %v344
    %v414 = vpop.f32.mrf.mxu0
    %v415 = vadd.f32 %v328, %v414
    %416 = vdwg.mxu0
    %v417 = vtanh.pop %v371
    %v418 = vtanh.pop %v403
    %v419 = vtanh.pop %v374
    %v420 = vtanh.pop %v406
    %v421 = vtanh.pop %v377
    %v422 = vtanh.pop %v409
    %v423 = vtanh.pop %v380
    %v424 = vtanh.pop %v412
    %v425 = vtanh.pop %v383
    %v426 = vtanh.pop %v415
    %v427 = vld [vmem:[%s5] sm:$0x7]
    %v428 = vld [vmem:[%s6] sm:$0x7]
    %430 = vset.pattern.permute.xlu0 0
    %431 = vperm.xlu0 %430, %v428
    %v432 = vpop.permute.xlu0 %431
    %v435 = vsel %vm330, %v427, 0
    %v438 = vsel %vm346, %v425, 0
    %v441 = vsel %vm346, %v426, 0
    %443 = vmatpush.msra.mxu0 0.0
    %444 = vmatpush.msra.mxu0 0.0
    %445 = vmatpush.msra.mxu0 0.0
    %446 = vmatpush.msra.mxu0 0.0
    %447 = vmatpush.msra.mxu0 0.0
    %448 = vmatpush.msra.mxu0 0.0
    %449 = vmatpush.msra.mxu0 0.0
    %450 = vmatpush.msra.mxu0 0.0
    %451 = vmatpush.msra.mxu0 0.0
    %452 = vmatpush.msra.mxu0 0.0
    %453 = vmatpush.msra.mxu0 0.0
    %454 = vmatpush.msra.mxu0 %v438
    %455 = vmatpush.msra.mxu0 %v423
    %456 = vmatpush.msra.mxu0 %v421
    %457 = vmatpush.msra.mxu0 %v419
    %458 = vmatpush.msra.mxu0 %v417
    %459 = vmatmul.f32.gmra.mxu0 %v435
    %v460 = vpop.f32.mrf.mxu0
    %v461 = vadd.f32 %v432, %v460
    %462 = vdwg.mxu0
    %463 = vmatpush.msra.mxu0 0.0
    %464 = vmatpush.msra.mxu0 0.0
    %465 = vmatpush.msra.mxu0 0.0
    %466 = vmatpush.msra.mxu0 0.0
    %467 = vmatpush.msra.mxu0 0.0
    %468 = vmatpush.msra.mxu0 0.0
    %469 = vmatpush.msra.mxu0 0.0
    %470 = vmatpush.msra.mxu0 0.0
    %471 = vmatpush.msra.mxu0 0.0
    %472 = vmatpush.msra.mxu0 0.0
    %473 = vmatpush.msra.mxu0 0.0
    %474 = vmatpush.msra.mxu0 %v441
    %475 = vmatpush.msra.mxu0 %v424
    %476 = vmatpush.msra.mxu0 %v422
    %477 = vmatpush.msra.mxu0 %v420
    %478 = vmatpush.msra.mxu0 %v418
    %479 = vmatmul.f32.gmra.mxu0 %v435
    %v480 = vpop.f32.mrf.mxu0
    %v481 = vadd.f32 %v432, %v480
    %482 = vdwg.mxu0
    %v483 = vmax.f32 %v461, 0.0
    %v484 = vmax.f32 %v481, 0.0
    %v487 = vrot.slane %v484, 4
    %v488 = vsel %vm346, %v483, %v487
    %490 = vst [vmem:[%s7] sm:$0x77] %v488
    // Predicated region
    $region34: #{fused_heads_forward.1} parent=1 // pred_check
      _
    $region35: #{fused_heads_forward.1} parent=1 // pred_check_branch
      %492 = sbr.rel (0) target = $region37
    $region36: #{fused_heads_forward.1} parent=1 // pred_region
      _
    $region37: #{fused_heads_forward.1} parent=1 // pred_fallthru
      _
    // Predicated region
    $region38: #{fused_heads_forward.1} parent=1 // pred_check
      _
    $region39: #{fused_heads_forward.1} parent=1 // pred_check_branch
      %494 = sbr.rel (0) target = $region41
    $region40: #{fused_heads_forward.1} parent=1 // pred_region
      _
    $region41: #{fused_heads_forward.1} parent=1 // pred_fallthru
      _
    %495 = vsyncpa [#allocation3], 1

</llo_original>
